<compile_context>
chip_gen: v6e
topology: v6e:2x2x1
jax: 0.10.0
libtpu: 0.0.40
codegen_flags: <defaults>
</compile_context>

<pallas_src>
import jax
import jax.numpy as jnp
from jax.experimental import pallas as pl
from jax.experimental.pallas import tpu as pltpu

_LANE = 128
_MIB = 1 << 20


def _concat_kernel(static_ref, dynamic_ref, out_ref):
    # static_ref: (block_n, Ds), dynamic_ref: (block_n, Dd)
    # out_ref:    (block_n, Ds + Dd)
    ds = static_ref.shape[-1]
    dd = dynamic_ref.shape[-1]
    # Dropout with p=0.0 is the identity (matches nn.Dropout(0.0)); both
    # column writes are lane-aligned because the wrapper enforces
    # Ds % 128 == 0 and Dd % 128 == 0.
    out_ref[:, 0:ds] = static_ref[...]
    out_ref[:, ds:ds + dd] = dynamic_ref[...]


def _sublane(dtype) -> int:
    """Minimum sublane packing for the dtype (rows per packed vreg tile)."""
    itemsize = jnp.dtype(dtype).itemsize
    return {4: 8, 2: 16, 1: 32}.get(itemsize, 8)


def _vmem_capacity_bytes() -> int:
    """Physical VMEM per TensorCore; conservative 64 MiB if unqueryable."""
    try:
        cap = int(pltpu.get_tpu_info().vmem_capacity_bytes)
        if cap > 0:
            return cap
    except Exception:  # pragma: no cover - any query failure -> safe default
        pass
    return 64 * _MIB


def _gen_params():
    """Generation-aware (per-step DMA byte target, scoped-VMEM cap)."""
    cap = _vmem_capacity_bytes()
    if cap <= 64 * _MIB:
        # v7x-class: 64 MiB physical VMEM/TC. ~7 MiB/step (~14 MiB
        # double-buffered) is already on the HBM roofline plateau and leaves
        # headroom for Mosaic internal scratch under a 48 MiB scoped cap.
        return 7 * _MIB, 48 * _MIB
    # v5e/v6e-class: 128 MiB VMEM. ~14 MiB/step (~28 MiB double-buffered).
    return 14 * _MIB, 96 * _MIB


def _auto_tile_n(ds, dd, dtype, target_step_bytes, max_tile_n=16384):
    """Pick a row-tile that moves ~target_step_bytes of HBM traffic per step."""
    itemsize = jnp.dtype(dtype).itemsize
    sub = _sublane(dtype)
    bytes_per_row = 2 * (ds + dd) * itemsize  # input tiles + output tile
    tile = max(target_step_bytes // bytes_per_row, sub)
    tile = min(tile, max_tile_n)
    tile = (tile // sub) * sub
    return max(tile, sub)


def combiner_forward(static_emb, dynamic_emb, mode="concat", tile_n=None,
                     min_pallas_bytes=1 * _MIB, min_blocks=8):
    """Pallas implementation of Combiner.forward (graph_conv=None, dropout=0)."""
    if mode == "static_only":
        return static_emb
    if mode == "dynamic_only":
        return dynamic_emb
    if mode != "concat":
        raise ValueError(f"Invalid combiner mode: {mode}")

    n, ds = static_emb.shape
    n2, dd = dynamic_emb.shape
    if n != n2:
        raise ValueError("static and dynamic embeddings must share dim 0")

    out_dtype = jnp.result_type(static_emb.dtype, dynamic_emb.dtype)
    itemsize = jnp.dtype(out_dtype).itemsize
    sub = _sublane(out_dtype)
    # Total HBM traffic: read both inputs + write the concatenated output.
    total_bytes = 2 * (static_emb.size + dynamic_emb.size) * itemsize

    # Fallback to XLA concat when the Pallas path offers nothing:
    #  - mixed dtypes (concat would promote; keep XLA's semantics),
    #  - Ds or Dd not lane-aligned (masked partial-lane column stores),
    #  - too few rows to even fill sublane tiles,
    #  - tiny problems where launch + per-grid-step overhead dominates.
    if (static_emb.dtype != dynamic_emb.dtype
            or ds % _LANE != 0
            or dd % _LANE != 0
            or n < 2 * sub
            or total_bytes < min_pallas_bytes):
        return jnp.concatenate([static_emb, dynamic_emb], axis=1)

    target_step_bytes, vmem_cap = _gen_params()
    if tile_n is None:
        tile_n = _auto_tile_n(ds, dd, out_dtype, target_step_bytes)
    # Keep tile_n a multiple of the sublane packing for this dtype.
    tile_n = max((int(tile_n) // sub) * sub, sub)

    # Never collapse to grid=(1,): a single step has no software pipelining
    # (input DMA, VMEM copy and output DMA serialize -> ~half the bandwidth)
    # and on v7x it pins all work to one TensorCore. Cap the block so the row
    # axis splits into at least `min_blocks` grid steps whenever possible.
    rows_cap = max(sub, ((n // max(min_blocks, 1)) // sub) * sub)
    block_n = min(tile_n, rows_cap)
    grid = (pl.cdiv(n, block_n),)  # ragged last block masked by Pallas

    out_dim = ds + dd
    # Double-buffered per-step VMEM footprint plus headroom, capped below the
    # physical per-generation budget (leaves room for Mosaic internal scratch).
    block_bytes = block_n * 2 * out_dim * itemsize
    vmem_limit = int(min(max(2 * block_bytes + 2 * _MIB, 16 * _MIB), vmem_cap))

    cost = pl.CostEstimate(flops=0, transcendentals=0,
                           bytes_accessed=int(total_bytes))

    return pl.pallas_call(
        _concat_kernel,
        out_shape=jax.ShapeDtypeStruct((n, out_dim), out_dtype),
        grid_spec=pltpu.PrefetchScalarGridSpec(
            num_scalar_prefetch=0,
            grid=grid,
            in_specs=[
                pl.BlockSpec((block_n, ds), lambda i: (i, 0)),
                pl.BlockSpec((block_n, dd), lambda i: (i, 0)),
            ],
            out_specs=pl.BlockSpec((block_n, out_dim), lambda i: (i, 0)),
        ),
        compiler_params=pltpu.CompilerParams(
            dimension_semantics=("parallel",),
            vmem_limit_bytes=vmem_limit,
        ),
        cost_estimate=cost,
    )(static_emb, dynamic_emb)


if __name__ == "__main__":
    key = jax.random.PRNGKey(0)
    k_static, k_dynamic = jax.random.split(key)

    # Modest shapes consistent with the module: N entities x 128-d embeddings.
    N = 1024
    static_emb_dim = 128
    dynamic_emb_dim = 128

    static_emb = jax.random.normal(
        k_static, (N, static_emb_dim), dtype=jnp.float32)
    dynamic_emb = jax.random.normal(
        k_dynamic, (N, dynamic_emb_dim), dtype=jnp.float32)

    ref = jnp.concatenate([static_emb, dynamic_emb], axis=1)

    # 1) Explicit row tile (capped by the min_blocks split -> multi-step grid).
    out_tiled = combiner_forward(static_emb, dynamic_emb, mode="concat",
                                 tile_n=256)
    out_tiled = jax.block_until_ready(out_tiled)
    assert out_tiled.shape == (N, static_emb_dim + dynamic_emb_dim)
    assert jnp.array_equal(out_tiled, ref), "Pallas tiled concat mismatch"

    # 2) Auto-sized, generation-aware tiles (grid always has >= min_blocks
    #    steps so DMA pipelining / v7x TC sharding kick in).
    out_auto = combiner_forward(static_emb, dynamic_emb, mode="concat")
    out_auto = jax.block_until_ready(out_auto)
    assert jnp.array_equal(out_auto, ref), "Pallas auto-tile concat mismatch"

    # 3) Ragged N (not divisible by the row tile) still correct.
    N_r = 1000
    out_ragged = combiner_forward(static_emb[:N_r], dynamic_emb[:N_r],
                                  mode="concat", tile_n=256)
    out_ragged = jax.block_until_ready(out_ragged)
    assert jnp.array_equal(out_ragged, ref[:N_r]), "Pallas ragged concat mismatch"

    # 4) bf16 path (16-row sublane packing) through the Pallas kernel.
    s_bf = jax.random.normal(k_static, (N, 256), dtype=jnp.bfloat16)
    d_bf = jax.random.normal(k_dynamic, (N, 256), dtype=jnp.bfloat16)
    out_bf = combiner_forward(s_bf, d_bf, mode="concat")
    out_bf = jax.block_until_ready(out_bf)
    assert jnp.array_equal(out_bf, jnp.concatenate([s_bf, d_bf], axis=1)), \
        "Pallas bf16 concat mismatch"

    # 5) Tiny-N path falls back to XLA concat (still exact).
    out_small = combiner_forward(static_emb[:16], dynamic_emb[:16],
                                 mode="concat")
    assert jnp.array_equal(out_small, ref[:16])

    # 6) Pass-through modes.
    assert jnp.array_equal(
        combiner_forward(static_emb, dynamic_emb, mode="static_only"),
        static_emb)
    assert jnp.array_equal(
        combiner_forward(static_emb, dynamic_emb, mode="dynamic_only"),
        dynamic_emb)

    print("KERNEL_OK")
</pallas_src>

<mosaic_0001>
module attributes {stable_mosaic.version = 11 : i64} {
  func.func @_concat_kernel(%arg0: i32, %arg1: memref<128x128xf32, #tpu.memory_space<vmem>>, %arg2: memref<128x128xf32, #tpu.memory_space<vmem>>, %arg3: memref<128x256xf32, #tpu.memory_space<vmem>>) attributes {dimension_semantics = [#tpu.dimension_semantics<parallel>], iteration_bounds = array<i64: 8>, scalar_prefetch = 0 : i64, scratch_operands = 0 : i64, tpu.core_type = #tpu.core_type<tc>, window_params = [{transform_indices = @transform_0, window_bounds = array<i64: 128, 128>}, {transform_indices = @transform_1, window_bounds = array<i64: 128, 128>}, {transform_indices = @transform_2, window_bounds = array<i64: 128, 256>}]} {
    %c0 = arith.constant 0 : index
    %c0_0 = arith.constant 0 : index
    %0 = vector.load %arg1[%c0, %c0_0] : memref<128x128xf32, #tpu.memory_space<vmem>>, vector<128x128xf32>
    %c0_1 = arith.constant 0 : index
    %c0_2 = arith.constant 0 : index
    %1 = vector.load %arg3[%c0_1, %c0_2] : memref<128x256xf32, #tpu.memory_space<vmem>>, vector<128x128xf32>
    tpu.vector_store %arg3[%c0_1, %c0_2], %0 {strides = array<i32>} : memref<128x256xf32, #tpu.memory_space<vmem>>, vector<128x128xf32>,
    %c0_3 = arith.constant 0 : index
    %c0_4 = arith.constant 0 : index
    %2 = vector.load %arg2[%c0_3, %c0_4] : memref<128x128xf32, #tpu.memory_space<vmem>>, vector<128x128xf32>
    %c0_5 = arith.constant 0 : index
    %c128 = arith.constant 128 : index
    %3 = vector.load %arg3[%c0_5, %c128] : memref<128x256xf32, #tpu.memory_space<vmem>>, vector<128x128xf32>
    tpu.vector_store %arg3[%c0_5, %c128], %2 {strides = array<i32>} : memref<128x256xf32, #tpu.memory_space<vmem>>, vector<128x128xf32>,
    return
  }
  func.func @transform_0(%arg0: i32) -> (i32, i32) {
    %c0_i32 = arith.constant 0 : i32
    %c0_i32_0 = arith.constant 0 : i32
    return %arg0, %c0_i32 : i32, i32
  }
  func.func @transform_1(%arg0: i32) -> (i32, i32) {
    %c0_i32 = arith.constant 0 : i32
    %c0_i32_0 = arith.constant 0 : i32
    return %arg0, %c0_i32 : i32, i32
  }
  func.func @transform_2(%arg0: i32) -> (i32, i32) {
    %c0_i32 = arith.constant 0 : i32
    %c0_i32_0 = arith.constant 0 : i32
    return %arg0, %c0_i32 : i32, i32
  }
}

</mosaic_0001>

<llo_original>
// kernel: tpu_custom_call.1
$region0: #{tpu_custom_call.1}
  #allocation0 [shape = 'u32[]', space=smem, size = 0x4, offset = 0x4, fixed_abs, tag = 'smem constant byte address 0x4 - core index']
  #allocation1 [shape = 'u32[144,128]{1,0:T(1,128)}', space=vmem, size = 0x12000, scoped, tag = 'internal scratch']
  %s0 = inlined_call_operand.hbm [shape: f32[1024,128], index: 0, kind: input, shape index: {}]
  %s1 = inlined_call_operand.hbm [shape: f32[1024,128], index: 1, kind: input, shape index: {}]
  %s2 = inlined_call_operand.hbm [shape: f32[1024,256], index: 2, kind: output, shape index: {}]
  %s3 = sld [smem:[#allocation0]]
  $region49: #{tpu_custom_call.1} parent=0
    _
  %s5 = ssub.s32 1, %s3
  %s6 = scalar_select 0, %s5, %s3
  $region1: #{tpu_custom_call.1} parent=0
    #allocation2 [shape = 'u8[131072]{0}', space=vmem, size = 0x20000, scoped, tag = 'input window, operand 0']
    #allocation3 [shape = 's32[2]{0}', space=sflag, size = 0x8, scoped, tag = 'scoped memory for tpu_custom_call.1']
    #allocation4 [shape = 's32[2]{0}', space=sflag, size = 0x8, scoped, tag = 'scoped memory for tpu_custom_call.1']
    #allocation5 [shape = 'u8[131072]{0}', space=vmem, size = 0x20000, scoped, tag = 'input window, operand 1']
    #allocation6 [shape = 's32[2]{0}', space=sflag, size = 0x8, scoped, tag = 'scoped memory for tpu_custom_call.1']
    #allocation7 [shape = 'u8[262144]{0}', space=vmem, size = 0x40000, scoped, tag = 'output window, operand 0']
    %7 = vsyncpa [#allocation3], 0
    %s8 = scalar_lea.sflag [#allocation3], 1
    %9 = vsyncpa %s8, 0
    %10 = vsyncpa [#allocation6], 0
    %s11 = scalar_lea.sflag [#allocation6], 1
    %12 = vsyncpa %s11, 0
    %13 = vsyncpa [#allocation4], 0
    %s14 = scalar_lea.sflag [#allocation4], 1
    %15 = vsyncpa %s14, 0
    loop: start=0, step=1, limit=10
    $region2: #{tpu_custom_call.1} parent=1 // loop_pre_header
      _
    $region3: #{tpu_custom_call.1} parent=1 // loop_header
      %s17 = sphi 0, %s21
      %p18 = scmp.ge.s32.totalorder %s17, 10
      %s27 = sphi 0, %s29
      %s30 = sphi 0, %s27
      %s31 = sphi 0, %s30
      %s47 = sphi 0, %s31
      %s53 = sphi 0, %s55
      %s56 = sphi 0, %s53
      %s57 = sphi 0, %s56
      %s73 = sphi 0, %s57
      %s79 = sphi 0, %s81
      %s82 = sphi 0, %s79
      %s83 = sphi 0, %s82
      %s99 = sphi 0, %s83
    $region4: #{tpu_custom_call.1} parent=1 // loop_header_branch
      %20 = sbr.rel (%p18) target = $region8
    $region5: #{tpu_custom_call.1} parent=1 // loop_body
      %s22 = ssub.s32 %s17, 1
      %s23 = ssub.s32 %s17, 2
      %s24 = sadd.s32 %s17, 1
      %s25 = ssub.s32 %s17, %s24
      %p26 = scmp.eq.s32.totalorder %s25, 0
      %s28 = sadd.s32 %s27, 1
      %s29 = scalar_select %p26, %s27, %s28
      %p32 = pneg %p26
      %p33 = scmp.eq.s32.totalorder %s17, 7
      %p34 = por %p32, %p33
      %p35 = scmp.ne.s32.totalorder %s27, %s30
      %p36 = scmp.eq.s32.totalorder %s17, 0
      %p37 = por %p35, %p36
      %p38 = scmp.ne.s32.totalorder %s27, %s30
      %p39 = scmp.eq.s32.totalorder %s22, 7
      %p40 = por %p38, %p39
      %p41 = scmp.ne.s32.totalorder %s30, %s31
      %p42 = scmp.eq.s32.totalorder %s22, 0
      %p43 = por %p41, %p42
      %p44 = scmp.ne.s32.totalorder %s30, %s31
      %p45 = scmp.eq.s32.totalorder %s23, 7
      %p46 = por %p44, %p45
      %p48 = scmp.ne.s32.totalorder %s31, %s47
      %p49 = scmp.eq.s32.totalorder %s23, 0
      %p50 = por %p48, %p49
      %s51 = ssub.s32 %s17, %s24
      %p52 = scmp.eq.s32.totalorder %s51, 0
      %s54 = sadd.s32 %s53, 1
      %s55 = scalar_select %p52, %s53, %s54
      %p58 = pneg %p52
      %p59 = scmp.eq.s32.totalorder %s17, 7
      %p60 = por %p58, %p59
      %p61 = scmp.ne.s32.totalorder %s53, %s56
      %p62 = scmp.eq.s32.totalorder %s17, 0
      %p63 = por %p61, %p62
      %p64 = scmp.ne.s32.totalorder %s53, %s56
      %p65 = scmp.eq.s32.totalorder %s22, 7
      %p66 = por %p64, %p65
      %p67 = scmp.ne.s32.totalorder %s56, %s57
      %p68 = scmp.eq.s32.totalorder %s22, 0
      %p69 = por %p67, %p68
      %p70 = scmp.ne.s32.totalorder %s56, %s57
      %p71 = scmp.eq.s32.totalorder %s23, 7
      %p72 = por %p70, %p71
      %p74 = scmp.ne.s32.totalorder %s57, %s73
      %p75 = scmp.eq.s32.totalorder %s23, 0
      %p76 = por %p74, %p75
      %s77 = ssub.s32 %s17, %s24
      %p78 = scmp.eq.s32.totalorder %s77, 0
      %s80 = sadd.s32 %s79, 1
      %s81 = scalar_select %p78, %s79, %s80
      %p84 = pneg %p78
      %p85 = scmp.eq.s32.totalorder %s17, 7
      %p86 = por %p84, %p85
      %p87 = scmp.ne.s32.totalorder %s79, %s82
      %p88 = scmp.eq.s32.totalorder %s17, 0
      %p89 = por %p87, %p88
      %p90 = scmp.ne.s32.totalorder %s79, %s82
      %p91 = scmp.eq.s32.totalorder %s22, 7
      %p92 = por %p90, %p91
      %p93 = scmp.ne.s32.totalorder %s82, %s83
      %p94 = scmp.eq.s32.totalorder %s22, 0
      %p95 = por %p93, %p94
      %p96 = scmp.ne.s32.totalorder %s82, %s83
      %p97 = scmp.eq.s32.totalorder %s23, 7
      %p98 = por %p96, %p97
      %p100 = scmp.ne.s32.totalorder %s83, %s99
      %p101 = scmp.eq.s32.totalorder %s23, 0
      %p102 = por %p100, %p101
      %p103 = scmp.le.s32.totalorder 1, %s17
      %p104 = scmp.lt.s32.totalorder %s17, 9
      %p105 = pnand %p103, %p104
      %p106 = pneg %p105
      // Predicated region
      $region9: #{tpu_custom_call.1} parent=5 // pred_check
        _
      $region10: #{tpu_custom_call.1} parent=5 // pred_check_branch
        %108 = sbr.rel (%p105) target = $region12
      $region11: #{tpu_custom_call.1} parent=5 // pred_region
        %s109 = ssub.s32 %s17, 1
      $region12: #{tpu_custom_call.1} parent=5 // pred_fallthru
        _
      %p110 = scmp.lt.s32.totalorder %s17, 8
      // Predicated region
      $region13: #{tpu_custom_call.1} parent=5 // pred_check
        %p111 = pneg %p110
      $region14: #{tpu_custom_call.1} parent=5 // pred_check_branch
        %113 = sbr.rel (%p111) target = $region16
      $region15: #{tpu_custom_call.1} parent=5 // pred_region
        // Predicated region
        $region17: #{tpu_custom_call.1} parent=15 // pred_check
          %p114 = pneg %p37
        $region18: #{tpu_custom_call.1} parent=15 // pred_check_branch
          %116 = sbr.rel (%p114) target = $region20
        $region19: #{tpu_custom_call.1} parent=15 // pred_region
          %s117 = sand.u32 %s27, 1
          %s118 = scalar_lea.sflag [#allocation3], %s117
          %s119 = sand.u32 %s27, 1
          %s120 = smul.addr %s119, 128
          %s121 = scalar_lea.vmem [#allocation2], %s120
          %s122 = smul.u32 16, %s17
          %s124 = ssub.s32 2048, 2048
          %125 = vsyncadd %s118, %s124
          %s126 = smul.addr %s122, 128
          %s127 = scalar_lea.hbm %s0, %s126
          %s128 = sshll.u32 %s121, 4
          %s129 = int_to_ptr.vmem [resolvable:$true] %s128
          %134 = dma.hbm_to_vmem [thread:$0]  %s127, 2048, %s129, %s118, 128, 128, 8
        $region20: #{tpu_custom_call.1} parent=15 // pred_fallthru
          _
        // Predicated region
        $region21: #{tpu_custom_call.1} parent=15 // pred_check
          %p135 = pneg %p63
        $region22: #{tpu_custom_call.1} parent=15 // pred_check_branch
          %137 = sbr.rel (%p135) target = $region24
        $region23: #{tpu_custom_call.1} parent=15 // pred_region
          %s138 = sand.u32 %s53, 1
          %s139 = scalar_lea.sflag [#allocation6], %s138
          %s140 = sand.u32 %s53, 1
          %s141 = smul.addr %s140, 128
          %s142 = scalar_lea.vmem [#allocation5], %s141
          %s143 = smul.u32 16, %s17
          %s145 = ssub.s32 2048, 2048
          %146 = vsyncadd %s139, %s145
          %s147 = smul.addr %s143, 128
          %s148 = scalar_lea.hbm %s1, %s147
          %s149 = sshll.u32 %s142, 4
          %s150 = int_to_ptr.vmem [resolvable:$true] %s149
          %155 = dma.hbm_to_vmem [thread:$0]  %s148, 2048, %s150, %s139, 128, 128, 8
        $region24: #{tpu_custom_call.1} parent=15 // pred_fallthru
          _
      $region16: #{tpu_custom_call.1} parent=5 // pred_fallthru
        _
      %p156 = scmp.le.s32.totalorder 1, %s17
      %p157 = scmp.lt.s32.totalorder %s17, 9
      %p158 = pnand %p156, %p157
      %p159 = pneg %p158
      // Predicated region
      $region25: #{tpu_custom_call.1} parent=5 // pred_check
        _
      $region26: #{tpu_custom_call.1} parent=5 // pred_check_branch
        %161 = sbr.rel (%p158) target = $region28
      $region27: #{tpu_custom_call.1} parent=5 // pred_region
        %s162 = ssub.s32 %s17, 1
        %s163 = sand.u32 %s30, 1
        %s164 = scalar_lea.sflag [#allocation3], %s163
        %s165 = sand.u32 %s30, 1
        %s166 = smul.addr %s165, 128
        %s167 = scalar_lea.vmem [#allocation2], %s166
        // Predicated region
        $region29: #{tpu_custom_call.1} parent=27 // pred_check
          %p168 = pneg %p43
        $region30: #{tpu_custom_call.1} parent=27 // pred_check_branch
          %170 = sbr.rel (%p168) target = $region32
        $region31: #{tpu_custom_call.1} parent=27 // pred_region
          %171 = dma.done %s164, 2048
        $region32: #{tpu_custom_call.1} parent=27 // pred_fallthru
          _
        %s172 = sand.u32 %s56, 1
        %s173 = scalar_lea.sflag [#allocation6], %s172
        %s174 = sand.u32 %s56, 1
        %s175 = smul.addr %s174, 128
        %s176 = scalar_lea.vmem [#allocation5], %s175
        // Predicated region
        $region33: #{tpu_custom_call.1} parent=27 // pred_check
          %p177 = pneg %p69
        $region34: #{tpu_custom_call.1} parent=27 // pred_check_branch
          %179 = sbr.rel (%p177) target = $region36
        $region35: #{tpu_custom_call.1} parent=27 // pred_region
          %180 = dma.done %s173, 2048
        $region36: #{tpu_custom_call.1} parent=27 // pred_fallthru
          _
        %s181 = sand.u32 %s30, 1
        %s182 = scalar_lea.sflag [#allocation3], %s181
        %s183 = sand.u32 %s30, 1
        %s184 = smul.addr %s183, 128
        %s185 = scalar_lea.vmem [#allocation2], %s184
        %p186 = pneg %p43
        %p187 = pneg %p40
        %s188 = sand.u32 %s56, 1
        %s189 = scalar_lea.sflag [#allocation6], %s188
        %s190 = sand.u32 %s56, 1
        %s191 = smul.addr %s190, 128
        %s192 = scalar_lea.vmem [#allocation5], %s191
        %p193 = pneg %p69
        %p194 = pneg %p66
        %p195 = pneg %p95
        %p196 = pneg %p92
        %s197 = sand.u32 %s82, 1
        %s198 = scalar_lea.sflag [#allocation4], %s197
        %s199 = sand.u32 %s82, 1
        %s200 = smul.addr %s199, 256
        %s201 = scalar_lea.vmem [#allocation7], %s200
        %s202 = smul.u32 16, %s22
        %s203 = smul.u32 16, %s22
        %s204 = smul.u32 16, %s22
        %v205 = vld [vmem:[%s167] sm:$0xff]
        %v206 = vld [vmem:[%s167 + $0x8] sm:$0xff]
        %v207 = vld [vmem:[%s167 + $0x10] sm:$0xff]
        %v208 = vld [vmem:[%s167 + $0x18] sm:$0xff]
        %v209 = vld [vmem:[%s167 + $0x20] sm:$0xff]
        %v210 = vld [vmem:[%s167 + $0x28] sm:$0xff]
        %v211 = vld [vmem:[%s167 + $0x30] sm:$0xff]
        %v212 = vld [vmem:[%s167 + $0x38] sm:$0xff]
        %v213 = vld [vmem:[%s167 + $0x40] sm:$0xff]
        %v214 = vld [vmem:[%s167 + $0x48] sm:$0xff]
        %v215 = vld [vmem:[%s167 + $0x50] sm:$0xff]
        %v216 = vld [vmem:[%s167 + $0x58] sm:$0xff]
        %v217 = vld [vmem:[%s167 + $0x60] sm:$0xff]
        %v218 = vld [vmem:[%s167 + $0x68] sm:$0xff]
        %v219 = vld [vmem:[%s167 + $0x70] sm:$0xff]
        %v220 = vld [vmem:[%s167 + $0x78] sm:$0xff]
        %221 = vst [vmem:[%s201] sm:$0xff] %v205
        %222 = vst [vmem:[%s201 + $0x10] sm:$0xff] %v206
        %223 = vst [vmem:[%s201 + $0x20] sm:$0xff] %v207
        %224 = vst [vmem:[%s201 + $0x30] sm:$0xff] %v208
        %225 = vst [vmem:[%s201 + $0x40] sm:$0xff] %v209
        %226 = vst [vmem:[%s201 + $0x50] sm:$0xff] %v210
        %227 = vst [vmem:[%s201 + $0x60] sm:$0xff] %v211
        %228 = vst [vmem:[%s201 + $0x70] sm:$0xff] %v212
        %229 = vst [vmem:[%s201 + $0x80] sm:$0xff] %v213
        %230 = vst [vmem:[%s201 + $0x90] sm:$0xff] %v214
        %231 = vst [vmem:[%s201 + $0xa0] sm:$0xff] %v215
        %232 = vst [vmem:[%s201 + $0xb0] sm:$0xff] %v216
        %233 = vst [vmem:[%s201 + $0xc0] sm:$0xff] %v217
        %234 = vst [vmem:[%s201 + $0xd0] sm:$0xff] %v218
        %235 = vst [vmem:[%s201 + $0xe0] sm:$0xff] %v219
        %236 = vst [vmem:[%s201 + $0xf0] sm:$0xff] %v220
        %v237 = vld [vmem:[%s176] sm:$0xff]
        %v238 = vld [vmem:[%s176 + $0x8] sm:$0xff]
        %v239 = vld [vmem:[%s176 + $0x10] sm:$0xff]
        %v240 = vld [vmem:[%s176 + $0x18] sm:$0xff]
        %v241 = vld [vmem:[%s176 + $0x20] sm:$0xff]
        %v242 = vld [vmem:[%s176 + $0x28] sm:$0xff]
        %v243 = vld [vmem:[%s176 + $0x30] sm:$0xff]
        %v244 = vld [vmem:[%s176 + $0x38] sm:$0xff]
        %v245 = vld [vmem:[%s176 + $0x40] sm:$0xff]
        %v246 = vld [vmem:[%s176 + $0x48] sm:$0xff]
        %v247 = vld [vmem:[%s176 + $0x50] sm:$0xff]
        %v248 = vld [vmem:[%s176 + $0x58] sm:$0xff]
        %v249 = vld [vmem:[%s176 + $0x60] sm:$0xff]
        %v250 = vld [vmem:[%s176 + $0x68] sm:$0xff]
        %v251 = vld [vmem:[%s176 + $0x70] sm:$0xff]
        %v252 = vld [vmem:[%s176 + $0x78] sm:$0xff]
        %253 = vst [vmem:[%s201 + $0x8] sm:$0xff] %v237
        %254 = vst [vmem:[%s201 + $0x18] sm:$0xff] %v238
        %255 = vst [vmem:[%s201 + $0x28] sm:$0xff] %v239
        %256 = vst [vmem:[%s201 + $0x38] sm:$0xff] %v240
        %257 = vst [vmem:[%s201 + $0x48] sm:$0xff] %v241
        %258 = vst [vmem:[%s201 + $0x58] sm:$0xff] %v242
        %259 = vst [vmem:[%s201 + $0x68] sm:$0xff] %v243
        %260 = vst [vmem:[%s201 + $0x78] sm:$0xff] %v244
        %261 = vst [vmem:[%s201 + $0x88] sm:$0xff] %v245
        %262 = vst [vmem:[%s201 + $0x98] sm:$0xff] %v246
        %263 = vst [vmem:[%s201 + $0xa8] sm:$0xff] %v247
        %264 = vst [vmem:[%s201 + $0xb8] sm:$0xff] %v248
        %265 = vst [vmem:[%s201 + $0xc8] sm:$0xff] %v249
        %266 = vst [vmem:[%s201 + $0xd8] sm:$0xff] %v250
        %267 = vst [vmem:[%s201 + $0xe8] sm:$0xff] %v251
        %268 = vst [vmem:[%s201 + $0xf8] sm:$0xff] %v252
        %s269 = sand.u32 %s82, 1
        %s270 = scalar_lea.sflag [#allocation4], %s269
        %s271 = sand.u32 %s82, 1
        %s272 = smul.addr %s271, 256
        %s273 = scalar_lea.vmem [#allocation7], %s272
        // Predicated region
        $region37: #{tpu_custom_call.1} parent=27 // pred_check
          %p274 = pneg %p92
        $region38: #{tpu_custom_call.1} parent=27 // pred_check_branch
          %276 = sbr.rel (%p274) target = $region40
        $region39: #{tpu_custom_call.1} parent=27 // pred_region
          %s277 = smul.u32 16, %s22
          %s279 = ssub.s32 4096, 4096
          %280 = vsyncadd %s270, %s279
          %s281 = smul.addr %s277, 2
          %s282 = smul.addr %s281, 128
          %s283 = scalar_lea.hbm %s2, %s282
          %s284 = sshll.u32 %s273, 4
          %s285 = int_to_ptr.vmem [resolvable:$true] %s284
          %290 = dma.vmem_to_hbm [thread:$0]  %s285, 4096, %s283, %s270, 256, 256, 16
        $region40: #{tpu_custom_call.1} parent=27 // pred_fallthru
          _
      $region28: #{tpu_custom_call.1} parent=5 // pred_fallthru
        _
      %p291 = scmp.le.s32.totalorder 2, %s17
      // Predicated region
      $region41: #{tpu_custom_call.1} parent=5 // pred_check
        %p292 = pneg %p291
      $region42: #{tpu_custom_call.1} parent=5 // pred_check_branch
        %294 = sbr.rel (%p292) target = $region44
      $region43: #{tpu_custom_call.1} parent=5 // pred_region
        %s295 = ssub.s32 %s17, 2
        // Predicated region
        $region45: #{tpu_custom_call.1} parent=43 // pred_check
          %p296 = pneg %p98
        $region46: #{tpu_custom_call.1} parent=43 // pred_check_branch
          %298 = sbr.rel (%p296) target = $region48
        $region47: #{tpu_custom_call.1} parent=43 // pred_region
          %s299 = sand.u32 %s83, 1
          %s300 = scalar_lea.sflag [#allocation4], %s299
          %s301 = sand.u32 %s83, 1
          %s302 = smul.addr %s301, 256
          %s303 = scalar_lea.vmem [#allocation7], %s302
          %304 = dma.done %s300, 4096
        $region48: #{tpu_custom_call.1} parent=43 // pred_fallthru
          _
      $region44: #{tpu_custom_call.1} parent=5 // pred_fallthru
        _
    $region6: #{tpu_custom_call.1} parent=1 // loop_footer
      %s21 = sadd.s32 1, %s17
    $region7: #{tpu_custom_call.1} parent=1 // loop_footer_branch
      %16 = sbr.rel target = $region3
    $region8: #{tpu_custom_call.1} parent=1 // loop_exit
      _
    %305 = vsyncpa [#allocation3], 1
    %s306 = scalar_lea.sflag [#allocation3], 1
    %307 = vsyncpa %s306, 1
    %308 = vsyncpa [#allocation6], 1
    %s309 = scalar_lea.sflag [#allocation6], 1
    %310 = vsyncpa %s309, 1
    %311 = vsyncpa [#allocation4], 1
    %s312 = scalar_lea.sflag [#allocation4], 1
    %313 = vsyncpa %s312, 1

</llo_original>
